<compile_context>
chip_gen: v7x
topology: tpu7x:2x2x1
jax: 0.10.0
libtpu: 0.0.40
codegen_flags: <defaults>
</compile_context>

<pallas_src>
import functools

import jax
import jax.numpy as jnp
from jax.experimental import pallas as pl
from jax.experimental.pallas import tpu as pltpu


def _lstm_single_step(x_f32, w_ih_bf16, bias_f32, H):
    """One LSTM timestep with zero initial state.  x_f32: (B, H_in)."""
    gates = jnp.dot(x_f32.astype(jnp.bfloat16), w_ih_bf16,
                    preferred_element_type=jnp.float32) + bias_f32      # (B, 4H)
    sig = jax.nn.sigmoid(gates)   # one EUP pass over the whole 4H block
    th = jnp.tanh(gates)          # one EUP pass (only the g slice is used)
    i = sig[:, 0 * H:1 * H]
    o = sig[:, 3 * H:4 * H]
    g = th[:, 2 * H:3 * H]
    c = i * g                     # c0 == 0  ->  f*c0 drops out
    return o * jnp.tanh(c)


def _language_model_kernel(
    x_ref,          # (B, D)              bf16
    w_emb_ref,      # (D, H)              bf16
    b_emb_ref,      # (1, H)              f32
    w_ih1_ref,      # (H, 4H)             bf16
    b1_ref,         # (1, 4H)             f32  (b_ih + b_hh)
    w_moe_ref,      # (H, E*H + GPAD)     bf16 [experts | gate | zero pad]
    b_moe_ref,      # (1, E*H + GPAD)     f32  [expert biases | zeros]
    w_ih2_ref,      # (H, 4H)             bf16
    b2_ref,         # (1, 4H)             f32
    w_fc_ref,       # (H, OPAD)           bf16 (zero-padded beyond O)
    b_fc_ref,       # (1, OPAD)           f32  (zero-padded beyond O)
    out_ref,        # (B, OPAD)  out: [:, :O] = logits, [:, O] = aux loss
    *,
    hidden_dim: int,
    num_experts: int,
    k: int,
    output_dim: int,
    gate_pad: int,
):
    H, E = hidden_dim, num_experts
    EH = E * H

    # ---- embedding: Linear(D -> H) --------------------------------------
    embed = jnp.dot(x_ref[...], w_emb_ref[...],
                    preferred_element_type=jnp.float32) + b_emb_ref[...]

    # ---- lstm1 (seq_len == 1) + residual ---------------------------------
    h1 = _lstm_single_step(embed, w_ih1_ref[...], b1_ref[...], H)
    out1 = h1 + embed                                                # (B, H)

    # ---- MoE: one fused matmul for all experts + the gate ----------------
    # columns [0:EH] = stacked expert outputs (bias folded in),
    # columns [EH:EH+E] = gate logits (no bias), rest = zero padding.
    moe_raw = jnp.dot(out1.astype(jnp.bfloat16), w_moe_ref[...],
                      preferred_element_type=jnp.float32) + b_moe_ref[...]
    expert_out = moe_raw[:, :EH]                                     # (B, EH)
    gate_raw = moe_raw[:, EH:]                                       # (B, GPAD)

    neg_inf = jnp.float32(-1e30)
    col = jax.lax.broadcasted_iota(jnp.int32, gate_raw.shape, 1)
    gate_logits = jnp.where(col < E, gate_raw, neg_inf)

    # top-k selection (k static & small); lowest-index tie-break
    selected = jnp.zeros(gate_logits.shape, dtype=jnp.bool_)
    work = gate_logits
    for _ in range(k):
        m = jnp.max(work, axis=-1, keepdims=True)
        is_max = work == m
        first_idx = jnp.min(jnp.where(is_max, col, gate_pad),
                            axis=-1, keepdims=True)
        pick = col == first_idx
        selected = jnp.logical_or(selected, pick)
        work = jnp.where(pick, neg_inf, work)

    masked = jnp.where(selected, gate_logits, neg_inf)
    mx = jnp.max(masked, axis=-1, keepdims=True)
    ex = jnp.where(selected, jnp.exp(masked - mx), 0.0)
    denom = jnp.sum(ex, axis=-1, keepdims=True)
    gates = ex * pl.reciprocal(denom, approx=True)   # (B, GPAD), zero off top-k

    # gated combine of lane-stacked expert outputs (32-lane slices + lane
    # broadcasts; avoids per-expert matmuls and any lane->sublane relayout)
    moe_out = gates[:, 0:1] * expert_out[:, 0:H]
    for e in range(1, E):
        moe_out = moe_out + gates[:, e:e + 1] * expert_out[:, e * H:(e + 1) * H]

    # aux loss: cv^2 of expert importance from the top-k renormalized gates
    importance = jnp.sum(gates[:, :E], axis=0, keepdims=True)        # (1, E)
    imp_mean = jnp.mean(importance, axis=-1, keepdims=True)          # (1, 1)
    imp_var = jnp.sum((importance - imp_mean) ** 2, axis=-1,
                      keepdims=True) / jnp.float32(max(E - 1, 1))
    aux = imp_var * pl.reciprocal(imp_mean * imp_mean + jnp.float32(1e-10),
                                  approx=True)                       # (1, 1)

    # ---- sigmoid, dropout (eval: identity), residual ----------------------
    moe_res = jax.nn.sigmoid(moe_out) + out1

    # ---- lstm2 + residual --------------------------------------------------
    h2 = _lstm_single_step(moe_res, w_ih2_ref[...], b2_ref[...], H)
    out2 = h2 + moe_res

    # ---- dropout (eval: identity), final fc (lane-dense, aux folded in) ----
    logits = jnp.dot(out2.astype(jnp.bfloat16), w_fc_ref[...],
                     preferred_element_type=jnp.float32) + b_fc_ref[...]  # (B, OPAD)
    ocol = jax.lax.broadcasted_iota(jnp.int32, logits.shape, 1)
    out_ref[...] = jnp.where(ocol < output_dim, logits,
                             jnp.where(ocol == output_dim, aux, 0.0))


def init_params(key, input_dim, hidden_dim, output_dim, num_experts):
    """Deterministic init in PyTorch param shapes, then packed for the kernel."""
    ks = jax.random.split(key, 13)
    s = 0.1

    def rnd(k, shape):
        return jax.random.normal(k, shape, dtype=jnp.float32) * s

    H, D, O, E = hidden_dim, input_dim, output_dim, num_experts
    EH = E * H
    GPAD = ((E + 127) // 128) * 128
    OPAD = ((O + 1 + 127) // 128) * 128   # +1 lane reserved for the aux loss

    # PyTorch-shaped draws (independent keys; previous b2 double-use fixed)
    w_emb = rnd(ks[0], (H, D))                  # nn.Linear(D, H).weight
    b_emb = rnd(ks[1], (1, H))
    w_ih1 = rnd(ks[2], (4 * H, H))              # lstm1 weight_ih_l0
    b1 = rnd(ks[3], (1, 4 * H)) + rnd(ks[4], (1, 4 * H))
    w_gate = rnd(ks[5], (E, H))                 # MoE gate Linear(H, E, bias=False)
    w_exp = rnd(ks[6], (E, H, H))               # E x Linear(H, H).weight
    b_exp = rnd(ks[7], (E, H))
    w_ih2 = rnd(ks[8], (4 * H, H))              # lstm2 weight_ih_l0
    b2 = rnd(ks[9], (1, 4 * H)) + rnd(ks[10], (1, 4 * H))
    w_fc = rnd(ks[11], (O, H))                  # nn.Linear(H, O).weight
    b_fc = rnd(ks[12], (1, O))

    # --- pack for the kernel (pre-transposed, lane-dense, bf16 MXU operands) ---
    w_exp_stacked = jnp.concatenate([w_exp[e].T for e in range(E)], axis=1)   # (H, EH)
    w_gate_pad = jnp.zeros((H, GPAD), jnp.float32).at[:, :E].set(w_gate.T)
    w_moe = jnp.concatenate([w_exp_stacked, w_gate_pad], axis=1)              # (H, EH+GPAD)
    b_moe = jnp.zeros((1, EH + GPAD), jnp.float32).at[0, :EH].set(b_exp.reshape(-1))

    w_fc_pad = jnp.zeros((H, OPAD), jnp.float32).at[:, :O].set(w_fc.T)
    b_fc_pad = jnp.zeros((1, OPAD), jnp.float32).at[0, :O].set(b_fc[0])

    return {
        "w_emb": w_emb.T.astype(jnp.bfloat16),   # (D, H)
        "b_emb": b_emb,
        "w_ih1": w_ih1.T.astype(jnp.bfloat16),   # (H, 4H)
        "b1": b1,
        "w_moe": w_moe.astype(jnp.bfloat16),     # (H, EH+GPAD)
        "b_moe": b_moe,
        "w_ih2": w_ih2.T.astype(jnp.bfloat16),   # (H, 4H)
        "b2": b2,
        "w_fc": w_fc_pad.astype(jnp.bfloat16),   # (H, OPAD)
        "b_fc": b_fc_pad,
    }


def language_model_forward(x, params, *, hidden_dim, output_dim, num_experts, k):
    B = x.shape[0]
    xf = x.reshape(B, -1).astype(jnp.bfloat16)   # x.view(batch_size, -1)

    OPAD = params["w_fc"].shape[1]
    GPAD = params["w_moe"].shape[1] - num_experts * hidden_dim

    kernel = functools.partial(
        _language_model_kernel,
        hidden_dim=hidden_dim,
        num_experts=num_experts,
        k=k,
        output_dim=output_dim,
        gate_pad=GPAD,
    )

    ins = (
        xf,
        params["w_emb"], params["b_emb"],
        params["w_ih1"], params["b1"],
        params["w_moe"], params["b_moe"],
        params["w_ih2"], params["b2"],
        params["w_fc"], params["b_fc"],
    )

    out = pl.pallas_call(
        kernel,
        out_shape=jax.ShapeDtypeStruct((B, OPAD), jnp.float32),
        in_specs=[pl.BlockSpec(memory_space=pltpu.MemorySpace.VMEM)] * len(ins),
        out_specs=pl.BlockSpec(memory_space=pltpu.MemorySpace.VMEM),
    )(*ins)

    # re-attach the seq_len=1 axis from `unsqueeze(1)`; aux sits in lane O, row 0
    logits = out[:, :output_dim].reshape(B, 1, output_dim)
    aux_loss = out[0, output_dim]
    return logits, aux_loss


if __name__ == "__main__":
    # Small shapes consistent with the forward: x flattens to input_dim features.
    batch = 2
    input_dim = 32          # x: (2, 4, 4, 2) -> view -> (2, 32)
    hidden_dim = 32
    output_dim = 16
    num_experts = 4
    k = 2

    key = jax.random.PRNGKey(0)
    kx, kp = jax.random.split(key)
    x = jax.random.normal(kx, (batch, 4, 4, 2), dtype=jnp.float32)

    params = init_params(kp, input_dim, hidden_dim, output_dim, num_experts)

    fwd = jax.jit(
        functools.partial(
            language_model_forward,
            hidden_dim=hidden_dim,
            output_dim=output_dim,
            num_experts=num_experts,
            k=k,
        )
    )
    logits, aux_loss = fwd(x, params)
    jax.block_until_ready((logits, aux_loss))

    assert logits.shape == (batch, 1, output_dim)
    assert aux_loss.shape == ()
    print("KERNEL_OK")
</pallas_src>

<mosaic_0001>
module attributes {stable_mosaic.version = 11 : i64} {
  func.func @_language_model_kernel(%arg0: memref<2x32xbf16, #tpu.memory_space<vmem>>, %arg1: memref<32x32xbf16, #tpu.memory_space<vmem>>, %arg2: memref<1x32xf32, #tpu.memory_space<vmem>>, %arg3: memref<32x128xbf16, #tpu.memory_space<vmem>>, %arg4: memref<1x128xf32, #tpu.memory_space<vmem>>, %arg5: memref<32x256xbf16, #tpu.memory_space<vmem>>, %arg6: memref<1x256xf32, #tpu.memory_space<vmem>>, %arg7: memref<32x128xbf16, #tpu.memory_space<vmem>>, %arg8: memref<1x128xf32, #tpu.memory_space<vmem>>, %arg9: memref<32x128xbf16, #tpu.memory_space<vmem>>, %arg10: memref<1x128xf32, #tpu.memory_space<vmem>>, %arg11: memref<2x128xf32, #tpu.memory_space<vmem>>) attributes {dimension_semantics = [], scalar_prefetch = 0 : i64, scratch_operands = 0 : i64, tpu.core_type = #tpu.core_type<tc>} {
    %c0 = arith.constant 0 : index
    %c0_0 = arith.constant 0 : index
    %0 = vector.load %arg0[%c0, %c0_0] : memref<2x32xbf16, #tpu.memory_space<vmem>>, vector<2x32xbf16>
    %c0_1 = arith.constant 0 : index
    %c0_2 = arith.constant 0 : index
    %1 = vector.load %arg1[%c0_1, %c0_2] : memref<32x32xbf16, #tpu.memory_space<vmem>>, vector<32x32xbf16>
    %cst = arith.constant dense<0.000000e+00> : vector<2x32xf32>
    %2 = tpu.matmul %0, %1, %cst {dimension_numbers = #tpu.dot_dimension_numbers<[1], [0], [0], [1], [0, 0, 1, 1], [], []>} : vector<2x32xbf16>, vector<32x32xbf16>, vector<2x32xf32> -> vector<2x32xf32>
    %c0_3 = arith.constant 0 : index
    %c0_4 = arith.constant 0 : index
    %3 = vector.load %arg2[%c0_3, %c0_4] : memref<1x32xf32, #tpu.memory_space<vmem>>, vector<1x32xf32>
    %4 = vector.broadcast %3 : vector<1x32xf32> to vector<2x32xf32>
    %5 = arith.addf %2, %4 : vector<2x32xf32>
    %c0_5 = arith.constant 0 : index
    %c0_6 = arith.constant 0 : index
    %6 = vector.load %arg3[%c0_5, %c0_6] : memref<32x128xbf16, #tpu.memory_space<vmem>>, vector<32x128xbf16>
    %c0_7 = arith.constant 0 : index
    %c0_8 = arith.constant 0 : index
    %7 = vector.load %arg4[%c0_7, %c0_8] : memref<1x128xf32, #tpu.memory_space<vmem>>, vector<1x128xf32>
    %8 = arith.truncf %5 : vector<2x32xf32> to vector<2x32xbf16>
    %cst_9 = arith.constant dense<0.000000e+00> : vector<2x128xf32>
    %9 = tpu.matmul %8, %6, %cst_9 {dimension_numbers = #tpu.dot_dimension_numbers<[1], [0], [0], [1], [0, 0, 1, 1], [], []>} : vector<2x32xbf16>, vector<32x128xbf16>, vector<2x128xf32> -> vector<2x128xf32>
    %10 = vector.broadcast %7 : vector<1x128xf32> to vector<2x128xf32>
    %11 = arith.addf %9, %10 : vector<2x128xf32>
    %12 = arith.negf %11 : vector<2x128xf32>
    %13 = math.exp %12 : vector<2x128xf32>
    %cst_10 = arith.constant 1.000000e+00 : f32
    %14 = vector.broadcast %cst_10 : f32 to vector<2x128xf32>
    %15 = arith.addf %14, %13 : vector<2x128xf32>
    %16 = arith.divf %14, %15 : vector<2x128xf32>
    %17 = math.tanh %11 : vector<2x128xf32>
    %18 = vector.extract_strided_slice %16 {offsets = [0, 0], sizes = [2, 32], strides = [1, 1]} : vector<2x128xf32> to vector<2x32xf32>
    %19 = vector.extract_strided_slice %16 {offsets = [0, 96], sizes = [2, 32], strides = [1, 1]} : vector<2x128xf32> to vector<2x32xf32>
    %20 = vector.extract_strided_slice %17 {offsets = [0, 64], sizes = [2, 32], strides = [1, 1]} : vector<2x128xf32> to vector<2x32xf32>
    %21 = arith.mulf %18, %20 : vector<2x32xf32>
    %22 = math.tanh %21 : vector<2x32xf32>
    %23 = arith.mulf %19, %22 : vector<2x32xf32>
    %24 = arith.addf %23, %5 : vector<2x32xf32>
    %25 = arith.truncf %24 : vector<2x32xf32> to vector<2x32xbf16>
    %c0_11 = arith.constant 0 : index
    %c0_12 = arith.constant 0 : index
    %26 = vector.load %arg5[%c0_11, %c0_12] : memref<32x256xbf16, #tpu.memory_space<vmem>>, vector<32x256xbf16>
    %cst_13 = arith.constant dense<0.000000e+00> : vector<2x256xf32>
    %27 = tpu.matmul %25, %26, %cst_13 {dimension_numbers = #tpu.dot_dimension_numbers<[1], [0], [0], [1], [0, 0, 1, 1], [], []>} : vector<2x32xbf16>, vector<32x256xbf16>, vector<2x256xf32> -> vector<2x256xf32>
    %c0_14 = arith.constant 0 : index
    %c0_15 = arith.constant 0 : index
    %28 = vector.load %arg6[%c0_14, %c0_15] : memref<1x256xf32, #tpu.memory_space<vmem>>, vector<1x256xf32>
    %29 = vector.broadcast %28 : vector<1x256xf32> to vector<2x256xf32>
    %30 = arith.addf %27, %29 : vector<2x256xf32>
    %31 = vector.extract_strided_slice %30 {offsets = [0, 0], sizes = [2, 128], strides = [1, 1]} : vector<2x256xf32> to vector<2x128xf32>
    %32 = vector.extract_strided_slice %30 {offsets = [0, 128], sizes = [2, 128], strides = [1, 1]} : vector<2x256xf32> to vector<2x128xf32>
    %33 = tpu.iota {dimensions = array<i32: 1>} : vector<2x128xi32>
    %c4_i32 = arith.constant 4 : i32
    %34 = vector.broadcast %c4_i32 : i32 to vector<2x128xi32>
    %35 = arith.cmpi slt, %33, %34 : vector<2x128xi32>
    %cst_16 = arith.constant -1.000000e+30 : f32
    %36 = vector.broadcast %cst_16 : f32 to vector<2x128xf32>
    %37 = arith.select %35, %32, %36 : vector<2x128xi1>, vector<2x128xf32>
    %false = arith.constant false
    %38 = vector.broadcast %false : i1 to vector<2x128xi1>
    %cst_17 = arith.constant dense<0xFF800000> : vector<2xf32>
    %39 = vector.multi_reduction <maximumf>, %37, %cst_17 [1] : vector<2x128xf32> to vector<2xf32>
    %40 = vector.shape_cast %39 : vector<2xf32> to vector<2x1xf32>
    %41 = vector.broadcast %40 : vector<2x1xf32> to vector<2x128xf32>
    %42 = arith.cmpf oeq, %37, %41 : vector<2x128xf32>
    %c128_i32 = arith.constant 128 : i32
    %43 = vector.broadcast %c128_i32 : i32 to vector<2x128xi32>
    %44 = arith.select %42, %33, %43 : vector<2x128xi1>, vector<2x128xi32>
    %cst_18 = arith.constant dense<2147483647> : vector<2xi32>
    %45 = vector.multi_reduction <minsi>, %44, %cst_18 [1] : vector<2x128xi32> to vector<2xi32>
    %46 = vector.shape_cast %45 : vector<2xi32> to vector<2x1xi32>
    %47 = vector.broadcast %46 : vector<2x1xi32> to vector<2x128xi32>
    %48 = arith.cmpi eq, %33, %47 : vector<2x128xi32>
    %49 = arith.ori %38, %48 : vector<2x128xi1>
    %cst_19 = arith.constant -1.000000e+30 : f32
    %50 = vector.broadcast %cst_19 : f32 to vector<2x128xf32>
    %51 = arith.select %48, %50, %37 : vector<2x128xi1>, vector<2x128xf32>
    %cst_20 = arith.constant dense<0xFF800000> : vector<2xf32>
    %52 = vector.multi_reduction <maximumf>, %51, %cst_20 [1] : vector<2x128xf32> to vector<2xf32>
    %53 = vector.shape_cast %52 : vector<2xf32> to vector<2x1xf32>
    %54 = vector.broadcast %53 : vector<2x1xf32> to vector<2x128xf32>
    %55 = arith.cmpf oeq, %51, %54 : vector<2x128xf32>
    %c128_i32_21 = arith.constant 128 : i32
    %56 = vector.broadcast %c128_i32_21 : i32 to vector<2x128xi32>
    %57 = arith.select %55, %33, %56 : vector<2x128xi1>, vector<2x128xi32>
    %cst_22 = arith.constant dense<2147483647> : vector<2xi32>
    %58 = vector.multi_reduction <minsi>, %57, %cst_22 [1] : vector<2x128xi32> to vector<2xi32>
    %59 = vector.shape_cast %58 : vector<2xi32> to vector<2x1xi32>
    %60 = vector.broadcast %59 : vector<2x1xi32> to vector<2x128xi32>
    %61 = arith.cmpi eq, %33, %60 : vector<2x128xi32>
    %62 = arith.ori %49, %61 : vector<2x128xi1>
    %cst_23 = arith.constant -1.000000e+30 : f32
    %63 = vector.broadcast %cst_23 : f32 to vector<2x128xf32>
    %64 = arith.select %62, %37, %63 : vector<2x128xi1>, vector<2x128xf32>
    %cst_24 = arith.constant dense<0xFF800000> : vector<2xf32>
    %65 = vector.multi_reduction <maximumf>, %64, %cst_24 [1] : vector<2x128xf32> to vector<2xf32>
    %66 = vector.shape_cast %65 : vector<2xf32> to vector<2x1xf32>
    %67 = vector.broadcast %66 : vector<2x1xf32> to vector<2x128xf32>
    %68 = arith.subf %64, %67 : vector<2x128xf32>
    %69 = math.exp %68 : vector<2x128xf32>
    %cst_25 = arith.constant 0.000000e+00 : f32
    %70 = vector.broadcast %cst_25 : f32 to vector<2x128xf32>
    %71 = arith.select %62, %69, %70 : vector<2x128xi1>, vector<2x128xf32>
    %cst_26 = arith.constant dense<0.000000e+00> : vector<2xf32>
    %72 = vector.multi_reduction <add>, %71, %cst_26 [1] : vector<2x128xf32> to vector<2xf32>
    %73 = vector.shape_cast %72 : vector<2xf32> to vector<2x1xf32>
    %74 = tpu.reciprocal %73 {approx = true} : vector<2x1xf32> -> vector<2x1xf32>
    %75 = vector.broadcast %74 : vector<2x1xf32> to vector<2x128xf32>
    %76 = arith.mulf %71, %75 : vector<2x128xf32>
    %77 = vector.extract_strided_slice %76 {offsets = [0, 0], sizes = [2, 1], strides = [1, 1]} : vector<2x128xf32> to vector<2x1xf32>
    %78 = vector.extract_strided_slice %31 {offsets = [0, 0], sizes = [2, 32], strides = [1, 1]} : vector<2x128xf32> to vector<2x32xf32>
    %79 = vector.broadcast %77 : vector<2x1xf32> to vector<2x32xf32>
    %80 = arith.mulf %79, %78 : vector<2x32xf32>
    %81 = vector.extract_strided_slice %76 {offsets = [0, 1], sizes = [2, 1], strides = [1, 1]} : vector<2x128xf32> to vector<2x1xf32>
    %82 = vector.extract_strided_slice %31 {offsets = [0, 32], sizes = [2, 32], strides = [1, 1]} : vector<2x128xf32> to vector<2x32xf32>
    %83 = vector.broadcast %81 : vector<2x1xf32> to vector<2x32xf32>
    %84 = arith.mulf %83, %82 : vector<2x32xf32>
    %85 = arith.addf %80, %84 : vector<2x32xf32>
    %86 = vector.extract_strided_slice %76 {offsets = [0, 2], sizes = [2, 1], strides = [1, 1]} : vector<2x128xf32> to vector<2x1xf32>
    %87 = vector.extract_strided_slice %31 {offsets = [0, 64], sizes = [2, 32], strides = [1, 1]} : vector<2x128xf32> to vector<2x32xf32>
    %88 = vector.broadcast %86 : vector<2x1xf32> to vector<2x32xf32>
    %89 = arith.mulf %88, %87 : vector<2x32xf32>
    %90 = arith.addf %85, %89 : vector<2x32xf32>
    %91 = vector.extract_strided_slice %76 {offsets = [0, 3], sizes = [2, 1], strides = [1, 1]} : vector<2x128xf32> to vector<2x1xf32>
    %92 = vector.extract_strided_slice %31 {offsets = [0, 96], sizes = [2, 32], strides = [1, 1]} : vector<2x128xf32> to vector<2x32xf32>
    %93 = vector.broadcast %91 : vector<2x1xf32> to vector<2x32xf32>
    %94 = arith.mulf %93, %92 : vector<2x32xf32>
    %95 = arith.addf %90, %94 : vector<2x32xf32>
    %96 = vector.extract_strided_slice %76 {offsets = [0, 0], sizes = [2, 4], strides = [1, 1]} : vector<2x128xf32> to vector<2x4xf32>
    %cst_27 = arith.constant dense<0.000000e+00> : vector<4xf32>
    %97 = vector.multi_reduction <add>, %96, %cst_27 [0] : vector<2x4xf32> to vector<4xf32>
    %98 = vector.shape_cast %97 : vector<4xf32> to vector<1x4xf32>
    %cst_28 = arith.constant dense<0.000000e+00> : vector<1xf32>
    %99 = vector.multi_reduction <add>, %98, %cst_28 [1] : vector<1x4xf32> to vector<1xf32>
    %100 = vector.shape_cast %99 : vector<1xf32> to vector<1x1xf32>
    %cst_29 = arith.constant 4.000000e+00 : f32
    %101 = vector.broadcast %cst_29 : f32 to vector<1x1xf32>
    %102 = arith.divf %100, %101 : vector<1x1xf32>
    %103 = vector.broadcast %102 : vector<1x1xf32> to vector<1x4xf32>
    %104 = arith.subf %98, %103 : vector<1x4xf32>
    %105 = arith.mulf %104, %104 : vector<1x4xf32>
    %cst_30 = arith.constant dense<0.000000e+00> : vector<1xf32>
    %106 = vector.multi_reduction <add>, %105, %cst_30 [1] : vector<1x4xf32> to vector<1xf32>
    %107 = vector.shape_cast %106 : vector<1xf32> to vector<1x1xf32>
    %cst_31 = arith.constant 3.000000e+00 : f32
    %108 = vector.broadcast %cst_31 : f32 to vector<1x1xf32>
    %109 = arith.divf %107, %108 : vector<1x1xf32>
    %110 = arith.mulf %102, %102 : vector<1x1xf32>
    %cst_32 = arith.constant 1.000000e-10 : f32
    %111 = vector.broadcast %cst_32 : f32 to vector<1x1xf32>
    %112 = arith.addf %110, %111 : vector<1x1xf32>
    %113 = tpu.reciprocal %112 {approx = true} : vector<1x1xf32> -> vector<1x1xf32>
    %114 = arith.mulf %109, %113 : vector<1x1xf32>
    %115 = arith.negf %95 : vector<2x32xf32>
    %116 = math.exp %115 : vector<2x32xf32>
    %cst_33 = arith.constant 1.000000e+00 : f32
    %117 = vector.broadcast %cst_33 : f32 to vector<2x32xf32>
    %118 = arith.addf %117, %116 : vector<2x32xf32>
    %119 = arith.divf %117, %118 : vector<2x32xf32>
    %120 = arith.addf %119, %24 : vector<2x32xf32>
    %c0_34 = arith.constant 0 : index
    %c0_35 = arith.constant 0 : index
    %121 = vector.load %arg7[%c0_34, %c0_35] : memref<32x128xbf16, #tpu.memory_space<vmem>>, vector<32x128xbf16>
    %c0_36 = arith.constant 0 : index
    %c0_37 = arith.constant 0 : index
    %122 = vector.load %arg8[%c0_36, %c0_37] : memref<1x128xf32, #tpu.memory_space<vmem>>, vector<1x128xf32>
    %123 = arith.truncf %120 : vector<2x32xf32> to vector<2x32xbf16>
    %cst_38 = arith.constant dense<0.000000e+00> : vector<2x128xf32>
    %124 = tpu.matmul %123, %121, %cst_38 {dimension_numbers = #tpu.dot_dimension_numbers<[1], [0], [0], [1], [0, 0, 1, 1], [], []>} : vector<2x32xbf16>, vector<32x128xbf16>, vector<2x128xf32> -> vector<2x128xf32>
    %125 = vector.broadcast %122 : vector<1x128xf32> to vector<2x128xf32>
    %126 = arith.addf %124, %125 : vector<2x128xf32>
    %127 = arith.negf %126 : vector<2x128xf32>
    %128 = math.exp %127 : vector<2x128xf32>
    %cst_39 = arith.constant 1.000000e+00 : f32
    %129 = vector.broadcast %cst_39 : f32 to vector<2x128xf32>
    %130 = arith.addf %129, %128 : vector<2x128xf32>
    %131 = arith.divf %129, %130 : vector<2x128xf32>
    %132 = math.tanh %126 : vector<2x128xf32>
    %133 = vector.extract_strided_slice %131 {offsets = [0, 0], sizes = [2, 32], strides = [1, 1]} : vector<2x128xf32> to vector<2x32xf32>
    %134 = vector.extract_strided_slice %131 {offsets = [0, 96], sizes = [2, 32], strides = [1, 1]} : vector<2x128xf32> to vector<2x32xf32>
    %135 = vector.extract_strided_slice %132 {offsets = [0, 64], sizes = [2, 32], strides = [1, 1]} : vector<2x128xf32> to vector<2x32xf32>
    %136 = arith.mulf %133, %135 : vector<2x32xf32>
    %137 = math.tanh %136 : vector<2x32xf32>
    %138 = arith.mulf %134, %137 : vector<2x32xf32>
    %139 = arith.addf %138, %120 : vector<2x32xf32>
    %140 = arith.truncf %139 : vector<2x32xf32> to vector<2x32xbf16>
    %c0_40 = arith.constant 0 : index
    %c0_41 = arith.constant 0 : index
    %141 = vector.load %arg9[%c0_40, %c0_41] : memref<32x128xbf16, #tpu.memory_space<vmem>>, vector<32x128xbf16>
    %cst_42 = arith.constant dense<0.000000e+00> : vector<2x128xf32>
    %142 = tpu.matmul %140, %141, %cst_42 {dimension_numbers = #tpu.dot_dimension_numbers<[1], [0], [0], [1], [0, 0, 1, 1], [], []>} : vector<2x32xbf16>, vector<32x128xbf16>, vector<2x128xf32> -> vector<2x128xf32>
    %c0_43 = arith.constant 0 : index
    %c0_44 = arith.constant 0 : index
    %143 = vector.load %arg10[%c0_43, %c0_44] : memref<1x128xf32, #tpu.memory_space<vmem>>, vector<1x128xf32>
    %144 = vector.broadcast %143 : vector<1x128xf32> to vector<2x128xf32>
    %145 = arith.addf %142, %144 : vector<2x128xf32>
    %146 = tpu.iota {dimensions = array<i32: 1>} : vector<2x128xi32>
    %c16_i32 = arith.constant 16 : i32
    %147 = vector.broadcast %c16_i32 : i32 to vector<2x128xi32>
    %148 = arith.cmpi slt, %146, %147 : vector<2x128xi32>
    %c16_i32_45 = arith.constant 16 : i32
    %149 = vector.broadcast %c16_i32_45 : i32 to vector<2x128xi32>
    %150 = arith.cmpi eq, %146, %149 : vector<2x128xi32>
    %cst_46 = arith.constant 0.000000e+00 : f32
    %151 = vector.shape_cast %114 : vector<1x1xf32> to vector<1x1xf32>
    %152 = vector.broadcast %151 : vector<1x1xf32> to vector<2x128xf32>
    %153 = vector.broadcast %cst_46 : f32 to vector<2x128xf32>
    %154 = arith.select %150, %152, %153 : vector<2x128xi1>, vector<2x128xf32>
    %155 = arith.select %148, %145, %154 : vector<2x128xi1>, vector<2x128xf32>
    %c0_47 = arith.constant 0 : index
    %c0_48 = arith.constant 0 : index
    %156 = vector.load %arg11[%c0_47, %c0_48] : memref<2x128xf32, #tpu.memory_space<vmem>>, vector<2x128xf32>
    tpu.vector_store %arg11[%c0_47, %c0_48], %155 {strides = array<i32>} : memref<2x128xf32, #tpu.memory_space<vmem>>, vector<2x128xf32>,
    return
  }
}

</mosaic_0001>

<llo_original>
// kernel: language_model_forward.1
$region0: #{language_model_forward.1}
  #allocation0 [shape = 'u32[]', space=smem, size = 0x4, offset = 0x4, fixed_abs, tag = 'smem constant byte address 0x4 - core index']
  #allocation1 [shape = 'u32[144,128]{1,0:T(1,128)}', space=vmem, size = 0x12000, scoped, tag = 'internal scratch']
  %s0 = inlined_call_operand.vmem [shape: bf16[2,32], index: 0, kind: input, shape index: {}]
  %s1 = inlined_call_operand.vmem [shape: bf16[32,32], index: 1, kind: input, shape index: {}]
  %s2 = inlined_call_operand.hbm [shape: f32[1,32], index: 2, kind: input, shape index: {}]
  %s3 = inlined_call_operand.vmem [shape: bf16[32,128], index: 3, kind: input, shape index: {}]
  %s4 = inlined_call_operand.hbm [shape: f32[1,128], index: 4, kind: input, shape index: {}]
  %s5 = inlined_call_operand.vmem [shape: bf16[32,256], index: 5, kind: input, shape index: {}]
  %s6 = inlined_call_operand.vmem [shape: f32[1,256], index: 6, kind: input, shape index: {}]
  %s7 = inlined_call_operand.vmem [shape: bf16[32,128], index: 7, kind: input, shape index: {}]
  %s8 = inlined_call_operand.hbm [shape: f32[1,128], index: 8, kind: input, shape index: {}]
  %s9 = inlined_call_operand.hbm [shape: bf16[32,128], index: 9, kind: input, shape index: {}]
  %s10 = inlined_call_operand.hbm [shape: f32[1,128], index: 10, kind: input, shape index: {}]
  %s11 = inlined_call_operand.vmem [shape: f32[2,128], index: 11, kind: output, shape index: {}]
  %s12 = sld [smem:[#allocation0]]
  $region74: #{language_model_forward.1} parent=0
    _
  %s14 = ssub.s32 1, %s12
  %s15 = scalar_select 0, %s14, %s12
  $region1: #{language_model_forward.1} parent=0
    #allocation2 [shape = 'u8[512]{0}', space=vmem, size = 0x400, scoped, tag = 'input window, operand 2, single buffered']
    #allocation3 [shape = 's32[1]{0}', space=sflag, size = 0x4, scoped, tag = 'scoped memory for language_model_forward.1']
    #allocation4 [shape = 'u8[512]{0}', space=vmem, size = 0x400, scoped, tag = 'input window, operand 4, single buffered']
    #allocation5 [shape = 's32[1]{0}', space=sflag, size = 0x4, scoped, tag = 'scoped memory for language_model_forward.1']
    #allocation6 [shape = 'u8[512]{0}', space=vmem, size = 0x400, scoped, tag = 'input window, operand 8, single buffered']
    #allocation7 [shape = 'u8[8192]{0}', space=vmem, size = 0x2000, scoped, tag = 'input window, operand 9, single buffered']
    #allocation8 [shape = 's32[1]{0}', space=sflag, size = 0x4, scoped, tag = 'scoped memory for language_model_forward.1']
    #allocation9 [shape = 'u8[512]{0}', space=vmem, size = 0x400, scoped, tag = 'input window, operand 10, single buffered']
    %16 = vsyncpa [#allocation3], 0
    %17 = vsyncpa [#allocation5], 0
    %18 = vsyncpa [#allocation8], 0
    // Predicated region
    $region2: #{language_model_forward.1} parent=1 // pred_check
      _
    $region3: #{language_model_forward.1} parent=1 // pred_check_branch
      %20 = sbr.rel (0) target = $region5
    $region4: #{language_model_forward.1} parent=1 // pred_region
      _
    $region5: #{language_model_forward.1} parent=1 // pred_fallthru
      _
    // Predicated region
    $region6: #{language_model_forward.1} parent=1 // pred_check
      _
    $region7: #{language_model_forward.1} parent=1 // pred_check_branch
      %22 = sbr.rel (0) target = $region9
    $region8: #{language_model_forward.1} parent=1 // pred_region
      _
    $region9: #{language_model_forward.1} parent=1 // pred_fallthru
      _
    // Predicated region
    $region10: #{language_model_forward.1} parent=1 // pred_check
      _
    $region11: #{language_model_forward.1} parent=1 // pred_check_branch
      %24 = sbr.rel (0) target = $region13
    $region12: #{language_model_forward.1} parent=1 // pred_region
      %s26 = ssub.s32 16, 16
      %27 = vsyncadd [#allocation3], %s26
      %s29 = sshll.u32 [#allocation2], 4
      %s30 = int_to_ptr.vmem [resolvable:$true] %s29
      %32 = dma.hbm_to_vmem [thread:$0]  %s2, 16, %s30, [#allocation3]
    $region13: #{language_model_forward.1} parent=1 // pred_fallthru
      _
    // Predicated region
    $region14: #{language_model_forward.1} parent=1 // pred_check
      _
    $region15: #{language_model_forward.1} parent=1 // pred_check_branch
      %34 = sbr.rel (0) target = $region17
    $region16: #{language_model_forward.1} parent=1 // pred_region
      _
    $region17: #{language_model_forward.1} parent=1 // pred_fallthru
      _
    // Predicated region
    $region18: #{language_model_forward.1} parent=1 // pred_check
      _
    $region19: #{language_model_forward.1} parent=1 // pred_check_branch
      %36 = sbr.rel (0) target = $region21
    $region20: #{language_model_forward.1} parent=1 // pred_region
      %s38 = ssub.s32 16, 16
      %39 = vsyncadd [#allocation5], %s38
      %s41 = sshll.u32 [#allocation4], 4
      %s42 = int_to_ptr.vmem [resolvable:$true] %s41
      %44 = dma.hbm_to_vmem [thread:$0]  %s4, 16, %s42, [#allocation5]
    $region21: #{language_model_forward.1} parent=1 // pred_fallthru
      _
    // Predicated region
    $region22: #{language_model_forward.1} parent=1 // pred_check
      _
    $region23: #{language_model_forward.1} parent=1 // pred_check_branch
      %46 = sbr.rel (0) target = $region25
    $region24: #{language_model_forward.1} parent=1 // pred_region
      _
    $region25: #{language_model_forward.1} parent=1 // pred_fallthru
      _
    // Predicated region
    $region26: #{language_model_forward.1} parent=1 // pred_check
      _
    $region27: #{language_model_forward.1} parent=1 // pred_check_branch
      %48 = sbr.rel (0) target = $region29
    $region28: #{language_model_forward.1} parent=1 // pred_region
      _
    $region29: #{language_model_forward.1} parent=1 // pred_fallthru
      _
    // Predicated region
    $region30: #{language_model_forward.1} parent=1 // pred_check
      _
    $region31: #{language_model_forward.1} parent=1 // pred_check_branch
      %50 = sbr.rel (0) target = $region33
    $region32: #{language_model_forward.1} parent=1 // pred_region
      _
    $region33: #{language_model_forward.1} parent=1 // pred_fallthru
      _
    // Predicated region
    $region34: #{language_model_forward.1} parent=1 // pred_check
      _
    $region35: #{language_model_forward.1} parent=1 // pred_check_branch
      %52 = sbr.rel (0) target = $region37
    $region36: #{language_model_forward.1} parent=1 // pred_region
      %s54 = ssub.s32 16, 16
      %55 = vsyncadd [#allocation5], %s54
      %s57 = sshll.u32 [#allocation6], 4
      %s58 = int_to_ptr.vmem [resolvable:$true] %s57
      %60 = dma.hbm_to_vmem [thread:$0]  %s8, 16, %s58, [#allocation5]
    $region37: #{language_model_forward.1} parent=1 // pred_fallthru
      _
    // Predicated region
    $region38: #{language_model_forward.1} parent=1 // pred_check
      _
    $region39: #{language_model_forward.1} parent=1 // pred_check_branch
      %62 = sbr.rel (0) target = $region41
    $region40: #{language_model_forward.1} parent=1 // pred_region
      %s64 = ssub.s32 256, 256
      %65 = vsyncadd [#allocation8], %s64
      %s66 = sshll.u32 [#allocation7], 4
      %s67 = int_to_ptr.vmem [resolvable:$true] %s66
      %72 = dma.hbm_to_vmem [thread:$0]  %s9, 256, %s67, [#allocation8], 64, 64, 4
    $region41: #{language_model_forward.1} parent=1 // pred_fallthru
      _
    // Predicated region
    $region42: #{language_model_forward.1} parent=1 // pred_check
      _
    $region43: #{language_model_forward.1} parent=1 // pred_check_branch
      %74 = sbr.rel (0) target = $region45
    $region44: #{language_model_forward.1} parent=1 // pred_region
      %s76 = ssub.s32 16, 16
      %77 = vsyncadd [#allocation8], %s76
      %s79 = sshll.u32 [#allocation9], 4
      %s80 = int_to_ptr.vmem [resolvable:$true] %s79
      %82 = dma.hbm_to_vmem [thread:$0]  %s10, 16, %s80, [#allocation8]
    $region45: #{language_model_forward.1} parent=1 // pred_fallthru
      _
    // Predicated region
    $region46: #{language_model_forward.1} parent=1 // pred_check
      _
    $region47: #{language_model_forward.1} parent=1 // pred_check_branch
      %84 = sbr.rel (0) target = $region49
    $region48: #{language_model_forward.1} parent=1 // pred_region
      %85 = dma.done [#allocation3], 16
    $region49: #{language_model_forward.1} parent=1 // pred_fallthru
      _
    // Predicated region
    $region50: #{language_model_forward.1} parent=1 // pred_check
      _
    $region51: #{language_model_forward.1} parent=1 // pred_check_branch
      %87 = sbr.rel (0) target = $region53
    $region52: #{language_model_forward.1} parent=1 // pred_region
      %88 = dma.done [#allocation5], 16
    $region53: #{language_model_forward.1} parent=1 // pred_fallthru
      _
    // Predicated region
    $region54: #{language_model_forward.1} parent=1 // pred_check
      _
    $region55: #{language_model_forward.1} parent=1 // pred_check_branch
      %90 = sbr.rel (0) target = $region57
    $region56: #{language_model_forward.1} parent=1 // pred_region
      %91 = dma.done [#allocation5], 16
    $region57: #{language_model_forward.1} parent=1 // pred_fallthru
      _
    // Predicated region
    $region58: #{language_model_forward.1} parent=1 // pred_check
      _
    $region59: #{language_model_forward.1} parent=1 // pred_check_branch
      %93 = sbr.rel (0) target = $region61
    $region60: #{language_model_forward.1} parent=1 // pred_region
      %94 = dma.done [#allocation8], 256
    $region61: #{language_model_forward.1} parent=1 // pred_fallthru
      _
    // Predicated region
    $region62: #{language_model_forward.1} parent=1 // pred_check
      _
    $region63: #{language_model_forward.1} parent=1 // pred_check_branch
      %96 = sbr.rel (0) target = $region65
    $region64: #{language_model_forward.1} parent=1 // pred_region
      %97 = dma.done [#allocation8], 16
    $region65: #{language_model_forward.1} parent=1 // pred_fallthru
      _
    %v99 = vld [vmem:[%s0] sm:$0x1]
    %v100 = vld [vmem:[%s1] sm:$0xf]
    %v101 = vld [vmem:[%s1 + $0x4] sm:$0xf]
    %v102 = vld [vmem:[%s1 + $0x8] sm:$0xf]
    %v103 = vld [vmem:[%s1 + $0xc] sm:$0xf]
    %v104 = vld [vmem:[#allocation2] sm:$0x1]
    %v106 = vlaneseq
    %v107 = vshrl.u32 %v106, 7
    %v108 = vsub.s32 0, %v107
    %v109 = vrot.slane %v104, %v108
    %v115 = vunpack.c.l.b16 %v100
    %v116 = vunpack.c.l.b16 %v101
    %v117 = vunpack.c.l.b16 %v102
    %v118 = vunpack.c.l.b16 %v103
    %v119 = vpack.c.b16 %v116, %v115
    %v120 = vpack.c.b16 %v118, %v117
    %vm123 = vcmask 261120
    %v125 = vsel %vm123, %v99, 0
    %127 = vmatprep.subr.bf16.mxu0 0
    %128 = vmatpush1.bf16.msra.mxu0 %v119
    %129 = vmatprep.subr.bf16.mxu0 0
    %130 = vmatpush1.bf16.msra.mxu0 %v120
    %131 = vmatprep.subr.bf16.mxu0 0
    %132 = vmatpush1.bf16.msra.mxu0 0
    %133 = vmatprep.subr.bf16.mxu0 0
    %134 = vmatpush1.bf16.msra.mxu0 0
    %135 = vmatprep.subr.bf16.mxu0 0
    %136 = vmatpush1.bf16.msra.mxu0 0
    %137 = vmatprep.subr.bf16.mxu0 0
    %138 = vmatpush1.bf16.msra.mxu0 0
    %139 = vmatprep.subr.bf16.mxu0 0
    %140 = vmatpush1.bf16.msra.mxu0 0
    %141 = vmatprep.subr.bf16.mxu0 0
    %142 = vmatpush1.bf16.msra.mxu0 0
    %143 = vmatprep.subr.bf16.mxu0 0
    %144 = vmatpush1.bf16.msra.mxu0 0
    %145 = vmatprep.subr.bf16.mxu0 0
    %146 = vmatpush1.bf16.msra.mxu0 0
    %147 = vmatprep.subr.bf16.mxu0 0
    %148 = vmatpush1.bf16.msra.mxu0 0
    %149 = vmatprep.subr.bf16.mxu0 0
    %150 = vmatpush1.bf16.msra.mxu0 0
    %151 = vmatprep.subr.bf16.mxu0 0
    %152 = vmatpush1.bf16.msra.mxu0 0
    %153 = vmatprep.subr.bf16.mxu0 0
    %154 = vmatpush1.bf16.msra.mxu0 0
    %155 = vmatprep.subr.bf16.mxu0 0
    %156 = vmatpush1.bf16.msra.mxu0 0
    %157 = vmatprep.subr.bf16.mxu0 0
    %158 = vmatpush1.bf16.msra.mxu0 0
    %159 = vmatprep.mubr.bf16.mxu0 0
    %160 = vmatmul.mubr.bf16.gmra.mrb[0].mxu0 %v125
    %v161 = vpop.f32.mrb[0].mxu0
    %v162 = vadd.f32 %v109, %v161
    %v163 = vpop.f32.mrb[0].mxu0
    %v164 = vpop.f32.mrb[0].mxu0
    %v165 = vpop.f32.mrb[0].mxu0
    %166 = vdwg.mxu0
    %v167 = vld [vmem:[%s3] sm:$0xf]
    %v168 = vld [vmem:[%s3 + $0x4] sm:$0xf]
    %v169 = vld [vmem:[%s3 + $0x8] sm:$0xf]
    %v170 = vld [vmem:[%s3 + $0xc] sm:$0xf]
    %v171 = vld [vmem:[#allocation4] sm:$0x1]
    %v172 = vpack.c.bf16 %v162, %v162
    %v174 = vlaneseq
    %v175 = vshrl.u32 %v174, 7
    %v176 = vsub.s32 0, %v175
    %v177 = vrot.slane %v171, %v176
    %v183 = vunpack.c.l.b16 %v167
    %v184 = vunpack.c.l.b16 %v168
    %v185 = vunpack.c.l.b16 %v169
    %v186 = vunpack.c.l.b16 %v170
    %v187 = vpack.c.b16 %v184, %v183
    %v188 = vpack.c.b16 %v186, %v185
    %v192 = vsel %vm123, %v172, 0
    %194 = vmatprep.subr.bf16.mxu0 0
    %195 = vmatpush1.bf16.msra.mxu0 %v187
    %196 = vmatprep.subr.bf16.mxu0 0
    %197 = vmatpush1.bf16.msra.mxu0 %v188
    %198 = vmatprep.subr.bf16.mxu0 0
    %199 = vmatpush1.bf16.msra.mxu0 0
    %200 = vmatprep.subr.bf16.mxu0 0
    %201 = vmatpush1.bf16.msra.mxu0 0
    %202 = vmatprep.subr.bf16.mxu0 0
    %203 = vmatpush1.bf16.msra.mxu0 0
    %204 = vmatprep.subr.bf16.mxu0 0
    %205 = vmatpush1.bf16.msra.mxu0 0
    %206 = vmatprep.subr.bf16.mxu0 0
    %207 = vmatpush1.bf16.msra.mxu0 0
    %208 = vmatprep.subr.bf16.mxu0 0
    %209 = vmatpush1.bf16.msra.mxu0 0
    %210 = vmatprep.subr.bf16.mxu0 0
    %211 = vmatpush1.bf16.msra.mxu0 0
    %212 = vmatprep.subr.bf16.mxu0 0
    %213 = vmatpush1.bf16.msra.mxu0 0
    %214 = vmatprep.subr.bf16.mxu0 0
    %215 = vmatpush1.bf16.msra.mxu0 0
    %216 = vmatprep.subr.bf16.mxu0 0
    %217 = vmatpush1.bf16.msra.mxu0 0
    %218 = vmatprep.subr.bf16.mxu0 0
    %219 = vmatpush1.bf16.msra.mxu0 0
    %220 = vmatprep.subr.bf16.mxu0 0
    %221 = vmatpush1.bf16.msra.mxu0 0
    %222 = vmatprep.subr.bf16.mxu0 0
    %223 = vmatpush1.bf16.msra.mxu0 0
    %224 = vmatprep.subr.bf16.mxu0 0
    %225 = vmatpush1.bf16.msra.mxu0 0
    %226 = vmatprep.mubr.bf16.mxu0 0
    %227 = vmatmul.mubr.bf16.gmra.mrb[0].mxu0 %v192
    %v228 = vpop.f32.mrb[0].mxu0
    %v229 = vadd.f32 %v177, %v228
    %v230 = vpop.f32.mrb[0].mxu0
    %v231 = vpop.f32.mrb[0].mxu0
    %v232 = vpop.f32.mrb[0].mxu0
    %233 = vdwg.mxu0
    %v234 = vxor.u32 %v229, 2147483648
    %v235 = vmul.f32 %v234, 1.442695
    %v236 = vpow.pop %v235
    %v237 = vadd.f32 %v236, 1.0
    %v238 = vrcp.pop %v237
    %v239 = vmul.f32 1.0, %v238
    %v240 = vtanh.pop %v229
    %242 = vrot.lane.b32.xlu0 %v240, 64
    %v243 = vpop.permute.xlu0 %242
    %v245 = vmul.f32 %v239, %v243
    %v246 = vtanh.pop %v245
    %248 = vrot.lane.b32.xlu0 %v246, 96
    %v249 = vpop.permute.xlu0 %248
    %v251 = vmul.f32 %v239, %v249
    %253 = vrot.lane.b32.xlu0 %v162, 96
    %v254 = vpop.permute.xlu0 %253
    %v256 = vadd.f32 %v251, %v254
    %v257 = vpack.c.bf16 %v256, %v256
    %v258 = vld [vmem:[%s5] sm:$0xff]
    %v259 = vld [vmem:[%s5 + $0x8] sm:$0xff]
    %v260 = vld [vmem:[%s5 + $0x10] sm:$0xff]
    %v261 = vld [vmem:[%s5 + $0x18] sm:$0xff]
    %v262 = vld [vmem:[%s6] sm:$0x3]
    %v264 = vlaneseq
    %v265 = vshrl.u32 %v264, 7
    %v266 = vsub.s32 0, %v265
    %v267 = vrot.slane %v262, %v266
    %v268 = vlaneseq
    %v269 = vshrl.u32 %v268, 7
    %v270 = vsub.s32 1, %v269
    %v271 = vrot.slane %v262, %v270
    %275 = vrot.lane.b32.xlu0 %v257, 32
    %v276 = vpop.permute.xlu0 %275
    %v281 = vunpack.c.l.b16 %v258
    %v282 = vunpack.c.h.b16 %v258
    %v283 = vunpack.c.l.b16 %v259
    %v284 = vunpack.c.h.b16 %v259
    %v285 = vunpack.c.l.b16 %v260
    %v286 = vunpack.c.h.b16 %v260
    %v287 = vunpack.c.l.b16 %v261
    %v288 = vunpack.c.h.b16 %v261
    %v289 = vpack.c.b16 %v283, %v281
    %v290 = vpack.c.b16 %v284, %v282
    %v291 = vpack.c.b16 %v287, %v285
    %v292 = vpack.c.b16 %v288, %v286
    %v298 = vsel %vm123, %v276, 0
    %300 = vmatprep.subr.bf16.mxu0 %v290
    %301 = vmatpush1.bf16.msra.mxu0 %v289
    %302 = vmatprep.subr.bf16.mxu0 %v292
    %303 = vmatpush1.bf16.msra.mxu0 %v291
    %304 = vmatprep.subr.bf16.mxu0 0
    %305 = vmatpush1.bf16.msra.mxu0 0
    %306 = vmatprep.subr.bf16.mxu0 0
    %307 = vmatpush1.bf16.msra.mxu0 0
    %308 = vmatprep.subr.bf16.mxu0 0
    %309 = vmatpush1.bf16.msra.mxu0 0
    %310 = vmatprep.subr.bf16.mxu0 0
    %311 = vmatpush1.bf16.msra.mxu0 0
    %312 = vmatprep.subr.bf16.mxu0 0
    %313 = vmatpush1.bf16.msra.mxu0 0
    %314 = vmatprep.subr.bf16.mxu0 0
    %315 = vmatpush1.bf16.msra.mxu0 0
    %316 = vmatprep.subr.bf16.mxu0 0
    %317 = vmatpush1.bf16.msra.mxu0 0
    %318 = vmatprep.subr.bf16.mxu0 0
    %319 = vmatpush1.bf16.msra.mxu0 0
    %320 = vmatprep.subr.bf16.mxu0 0
    %321 = vmatpush1.bf16.msra.mxu0 0
    %322 = vmatprep.subr.bf16.mxu0 0
    %323 = vmatpush1.bf16.msra.mxu0 0
    %324 = vmatprep.subr.bf16.mxu0 0
    %325 = vmatpush1.bf16.msra.mxu0 0
    %326 = vmatprep.subr.bf16.mxu0 0
    %327 = vmatpush1.bf16.msra.mxu0 0
    %328 = vmatprep.subr.bf16.mxu0 0
    %329 = vmatpush1.bf16.msra.mxu0 0
    %330 = vmatprep.subr.bf16.mxu0 0
    %331 = vmatpush1.bf16.msra.mxu0 0
    %332 = vmatprep.mubr.bf16.mxu0 0
    %333 = vmatmul.mubr.bf16.gmra.mrb[0].mxu0 %v298
    %v334 = vpop.f32.mrb[0].mxu0
    %v335 = vadd.f32 %v267, %v334
    %v336 = vpop.f32.mrb[0].mxu0
    %v337 = vadd.f32 %v271, %v336
    %v338 = vpop.f32.mrb[0].mxu0
    %v339 = vpop.f32.mrb[0].mxu0
    %340 = vdwg.mxu0
    %v341 = vlaneseq
    %v342 = vand.u32 %v341, 127
    %vm343 = vcmp.lt.s32.totalorder %v342, 4
    %v344 = vsel %vm343, %v337, -1e+30
    %vm345 = vcmask 1041408
    %v346 = vsel %vm345, %v344, -inf
    %347 = vmax.xlane.f32.xlu0 %v346
    %v348 = vpop.xlane.xlu0 %347
    %vm349 = vcmp.eq.f32.partialorder %v344, %v348
    %v350 = vsel %vm349, %v342, 128
    %v351 = vsel %vm345, %v350, 2147483647
    %v352 = vand.u32 %v351, 65535
    %v353 = vshra.s32 %v351, 16
    %v354 = vcvt.s32.f32 %v352
    %v355 = vcvt.s32.f32 %v353
    %356 = vmin.xlane.f32.xlu0 %v355
    %v357 = vpop.xlane.xlu0 %356
    %vm358 = vcmp.eq.f32.partialorder %v355, %v357
    %v359 = vsel %vm358, %v354, inf
    %360 = vmin.xlane.f32.xlu0 %v359
    %v361 = vpop.xlane.xlu0 %360
    %v362 = vcvt.f32.s32 %v361
    %v363 = vcvt.f32.s32 %v357
    %v364 = vshll.u32 %v363, 16
    %v365 = vadd.s32 %v364, %v362
    %vm366 = vcmp.eq.s32.totalorder %v342, %v365
    %v367 = vsel %vm366, -1e+30, %v344
    %v368 = vsel %vm345, %v367, -inf
    %369 = vmax.xlane.f32.xlu0 %v368
    %v370 = vpop.xlane.xlu0 %369
    %vm371 = vcmp.eq.f32.partialorder %v367, %v370
    %v372 = vsel %vm371, %v342, 128
    %v373 = vsel %vm345, %v372, 2147483647
    %v374 = vand.u32 %v373, 65535
    %v375 = vshra.s32 %v373, 16
    %v376 = vcvt.s32.f32 %v374
    %v377 = vcvt.s32.f32 %v375
    %378 = vmin.xlane.f32.xlu0 %v377
    %v379 = vpop.xlane.xlu0 %378
    %vm380 = vcmp.eq.f32.partialorder %v377, %v379
    %v381 = vsel %vm380, %v376, inf
    %382 = vmin.xlane.f32.xlu0 %v381
    %v383 = vpop.xlane.xlu0 %382
    %v384 = vcvt.f32.s32 %v383
    %v385 = vcvt.f32.s32 %v379
    %v386 = vshll.u32 %v385, 16
    %v387 = vadd.s32 %v386, %v384
    %vm388 = vcmp.eq.s32.totalorder %v342, %v387
    %vm389 = vmor %vm366, %vm388
    %v390 = vsel %vm389, %v344, -1e+30
    %v391 = vsel %vm345, %v390, -inf
    %392 = vmax.xlane.f32.xlu0 %v391
    %v393 = vpop.xlane.xlu0 %392
    %v394 = vsub.f32 %v390, %v393
    %v395 = vmul.f32 %v394, 1.442695
    %v396 = vpow.pop %v395
    %v397 = vsel %vm389, %v396, 0.0
    %v398 = vsel %vm345, %v397, 0.0
    %399 = vadd.xlane.f32.xlu0 %v398
    %v400 = vpop.xlane.xlu0 %399
    %v401 = vrcp.pop %v400
    %v402 = vmul.f32 %v397, %v401
    %404 = vset.pattern.permute.xlu0 0
    %405 = vperm.xlu0 %404, %v402
    %v406 = vpop.permute.xlu0 %405
    %v408 = vmul.f32 %v406, %v335
    %409 = vset.pattern.permute.xlu0 1
    %410 = vperm.xlu0 %409, %v402
    %v411 = vpop.permute.xlu0 %410
    %v413 = vmul.f32 %v411, %v335
    %415 = vrot.lane.b32.xlu0 %v413, 96
    %v416 = vpop.permute.xlu0 %415
    %v418 = vadd.f32 %v408, %v416
    %419 = vset.pattern.permute.xlu0 2
    %420 = vperm.xlu0 %419, %v402
    %v421 = vpop.permute.xlu0 %420
    %v423 = vmul.f32 %v421, %v335
    %425 = vrot.lane.b32.xlu0 %v423, 64
    %v426 = vpop.permute.xlu0 %425
    %v428 = vadd.f32 %v418, %v426
    %429 = vset.pattern.permute.xlu0 3
    %430 = vperm.xlu0 %429, %v402
    %v431 = vpop.permute.xlu0 %430
    %v433 = vmul.f32 %v431, %v335
    %435 = vrot.lane.b32.xlu0 %v433, 32
    %v436 = vpop.permute.xlu0 %435
    %v438 = vadd.f32 %v428, %v436
    %vm439 = vcmask 25600
    %v440 = vsel %vm439, %v402, 0.0
    %v441 = vrot.slane %v440, 4
    %v442 = vadd.f32 %v440, %v441
    %v443 = vrot.slane %v442, 2
    %v444 = vadd.f32 %v442, %v443
    %v445 = vrot.slane %v444, 1
    %v446 = vadd.f32 %v444, %v445
    %vm447 = vcmask 31744
    %v448 = vsel %vm447, %v446, 0.0
    %449 = vadd.xlane.f32.xlu0 %v448
    %v450 = vpop.xlane.xlu0 %449
    %v451 = vrcp.pop 4.0
    %v452 = vmul.f32 %v450, %v451
    %v453 = vsub.f32 %v446, %v452
    %v454 = vmul.f32 %v453, %v453
    %v455 = vsel %vm447, %v454, 0.0
    %456 = vadd.xlane.f32.xlu0 %v455
    %v457 = vpop.xlane.xlu0 %456
    %v458 = vrcp.pop 3.0
    %v459 = vmul.f32 %v457, %v458
    %v460 = vmul.f32 %v452, %v452
    %v461 = vadd.f32 %v460, 1e-10
    %v462 = vrcp.pop %v461
    %v463 = vmul.f32 %v459, %v462
    %v464 = vxor.u32 %v438, 2147483648
    %v465 = vmul.f32 %v464, 1.442695
    %v466 = vpow.pop %v465
    %v467 = vadd.f32 %v466, 1.0
    %v468 = vrcp.pop %v467
    %v469 = vmul.f32 1.0, %v468
    %471 = vrot.lane.b32.xlu0 %v256, 32
    %v472 = vpop.permute.xlu0 %471
    %v474 = vadd.f32 %v469, %v472
    %v475 = vld [vmem:[%s7] sm:$0xf]
    %v476 = vld [vmem:[%s7 + $0x4] sm:$0xf]
    %v477 = vld [vmem:[%s7 + $0x8] sm:$0xf]
    %v478 = vld [vmem:[%s7 + $0xc] sm:$0xf]
    %v479 = vld [vmem:[#allocation6] sm:$0x1]
    %v480 = vpack.c.bf16 %v474, %v474
    %v482 = vlaneseq
    %v483 = vshrl.u32 %v482, 7
    %v484 = vsub.s32 0, %v483
    %v485 = vrot.slane %v479, %v484
    %v491 = vunpack.c.l.b16 %v475
    %v492 = vunpack.c.l.b16 %v476
    %v493 = vunpack.c.l.b16 %v477
    %v494 = vunpack.c.l.b16 %v478
    %v495 = vpack.c.b16 %v492, %v491
    %v496 = vpack.c.b16 %v494, %v493
    %v500 = vsel %vm123, %v480, 0
    %502 = vmatprep.subr.bf16.mxu0 0
    %503 = vmatpush1.bf16.msra.mxu0 %v495
    %504 = vmatprep.subr.bf16.mxu0 0
    %505 = vmatpush1.bf16.msra.mxu0 %v496
    %506 = vmatprep.subr.bf16.mxu0 0
    %507 = vmatpush1.bf16.msra.mxu0 0
    %508 = vmatprep.subr.bf16.mxu0 0
    %509 = vmatpush1.bf16.msra.mxu0 0
    %510 = vmatprep.subr.bf16.mxu0 0
    %511 = vmatpush1.bf16.msra.mxu0 0
    %512 = vmatprep.subr.bf16.mxu0 0
    %513 = vmatpush1.bf16.msra.mxu0 0
    %514 = vmatprep.subr.bf16.mxu0 0
    %515 = vmatpush1.bf16.msra.mxu0 0
    %516 = vmatprep.subr.bf16.mxu0 0
    %517 = vmatpush1.bf16.msra.mxu0 0
    %518 = vmatprep.subr.bf16.mxu0 0
    %519 = vmatpush1.bf16.msra.mxu0 0
    %520 = vmatprep.subr.bf16.mxu0 0
    %521 = vmatpush1.bf16.msra.mxu0 0
    %522 = vmatprep.subr.bf16.mxu0 0
    %523 = vmatpush1.bf16.msra.mxu0 0
    %524 = vmatprep.subr.bf16.mxu0 0
    %525 = vmatpush1.bf16.msra.mxu0 0
    %526 = vmatprep.subr.bf16.mxu0 0
    %527 = vmatpush1.bf16.msra.mxu0 0
    %528 = vmatprep.subr.bf16.mxu0 0
    %529 = vmatpush1.bf16.msra.mxu0 0
    %530 = vmatprep.subr.bf16.mxu0 0
    %531 = vmatpush1.bf16.msra.mxu0 0
    %532 = vmatprep.subr.bf16.mxu0 0
    %533 = vmatpush1.bf16.msra.mxu0 0
    %534 = vmatprep.mubr.bf16.mxu0 0
    %535 = vmatmul.mubr.bf16.gmra.mrb[0].mxu0 %v500
    %v536 = vpop.f32.mrb[0].mxu0
    %v537 = vadd.f32 %v485, %v536
    %v538 = vpop.f32.mrb[0].mxu0
    %v539 = vpop.f32.mrb[0].mxu0
    %v540 = vpop.f32.mrb[0].mxu0
    %541 = vdwg.mxu0
    %v542 = vxor.u32 %v537, 2147483648
    %v543 = vmul.f32 %v542, 1.442695
    %v544 = vpow.pop %v543
    %v545 = vadd.f32 %v544, 1.0
    %v546 = vrcp.pop %v545
    %v547 = vmul.f32 1.0, %v546
    %v548 = vtanh.pop %v537
    %550 = vrot.lane.b32.xlu0 %v548, 64
    %v551 = vpop.permute.xlu0 %550
    %v553 = vmul.f32 %v547, %v551
    %v554 = vtanh.pop %v553
    %556 = vrot.lane.b32.xlu0 %v554, 96
    %v557 = vpop.permute.xlu0 %556
    %v559 = vmul.f32 %v547, %v557
    %561 = vrot.lane.b32.xlu0 %v474, 96
    %v562 = vpop.permute.xlu0 %561
    %v564 = vadd.f32 %v559, %v562
    %v565 = vpack.c.bf16 %v564, %v564
    %v566 = vld [vmem:[#allocation7] sm:$0xf]
    %v567 = vld [vmem:[#allocation7 + $0x4] sm:$0xf]
    %v568 = vld [vmem:[#allocation7 + $0x8] sm:$0xf]
    %v569 = vld [vmem:[#allocation7 + $0xc] sm:$0xf]
    %v570 = vld [vmem:[#allocation9] sm:$0x1]
    %v572 = vlaneseq
    %v573 = vshrl.u32 %v572, 7
    %v574 = vsub.s32 0, %v573
    %v575 = vrot.slane %v570, %v574
    %578 = vrot.lane.b32.xlu0 %v565, 32
    %v579 = vpop.permute.xlu0 %578
    %v584 = vunpack.c.l.b16 %v566
    %v585 = vunpack.c.l.b16 %v567
    %v586 = vunpack.c.l.b16 %v568
    %v587 = vunpack.c.l.b16 %v569
    %v588 = vpack.c.b16 %v585, %v584
    %v589 = vpack.c.b16 %v587, %v586
    %v593 = vsel %vm123, %v579, 0
    %595 = vmatprep.subr.bf16.mxu0 0
    %596 = vmatpush1.bf16.msra.mxu0 %v588
    %597 = vmatprep.subr.bf16.mxu0 0
    %598 = vmatpush1.bf16.msra.mxu0 %v589
    %599 = vmatprep.subr.bf16.mxu0 0
    %600 = vmatpush1.bf16.msra.mxu0 0
    %601 = vmatprep.subr.bf16.mxu0 0
    %602 = vmatpush1.bf16.msra.mxu0 0
    %603 = vmatprep.subr.bf16.mxu0 0
    %604 = vmatpush1.bf16.msra.mxu0 0
    %605 = vmatprep.subr.bf16.mxu0 0
    %606 = vmatpush1.bf16.msra.mxu0 0
    %607 = vmatprep.subr.bf16.mxu0 0
    %608 = vmatpush1.bf16.msra.mxu0 0
    %609 = vmatprep.subr.bf16.mxu0 0
    %610 = vmatpush1.bf16.msra.mxu0 0
    %611 = vmatprep.subr.bf16.mxu0 0
    %612 = vmatpush1.bf16.msra.mxu0 0
    %613 = vmatprep.subr.bf16.mxu0 0
    %614 = vmatpush1.bf16.msra.mxu0 0
    %615 = vmatprep.subr.bf16.mxu0 0
    %616 = vmatpush1.bf16.msra.mxu0 0
    %617 = vmatprep.subr.bf16.mxu0 0
    %618 = vmatpush1.bf16.msra.mxu0 0
    %619 = vmatprep.subr.bf16.mxu0 0
    %620 = vmatpush1.bf16.msra.mxu0 0
    %621 = vmatprep.subr.bf16.mxu0 0
    %622 = vmatpush1.bf16.msra.mxu0 0
    %623 = vmatprep.subr.bf16.mxu0 0
    %624 = vmatpush1.bf16.msra.mxu0 0
    %625 = vmatprep.subr.bf16.mxu0 0
    %626 = vmatpush1.bf16.msra.mxu0 0
    %627 = vmatprep.mubr.bf16.mxu0 0
    %628 = vmatmul.mubr.bf16.gmra.mrb[0].mxu0 %v593
    %v629 = vpop.f32.mrb[0].mxu0
    %v630 = vadd.f32 %v575, %v629
    %v631 = vpop.f32.mrb[0].mxu0
    %v632 = vpop.f32.mrb[0].mxu0
    %v633 = vpop.f32.mrb[0].mxu0
    %634 = vdwg.mxu0
    %vm635 = vcmp.lt.s32.totalorder %v342, 16
    %vm636 = vcmp.eq.s32.totalorder %v342, 16
    %v637 = vsel %vm636, %v463, 0.0
    %v638 = vsel %vm635, %v630, %v637
    %639 = vst [vmem:[%s11] sm:$0x3] %v638
    // Predicated region
    $region66: #{language_model_forward.1} parent=1 // pred_check
      _
    $region67: #{language_model_forward.1} parent=1 // pred_check_branch
      %641 = sbr.rel (0) target = $region69
    $region68: #{language_model_forward.1} parent=1 // pred_region
      _
    $region69: #{language_model_forward.1} parent=1 // pred_fallthru
      _
    // Predicated region
    $region70: #{language_model_forward.1} parent=1 // pred_check
      _
    $region71: #{language_model_forward.1} parent=1 // pred_check_branch
      %643 = sbr.rel (0) target = $region73
    $region72: #{language_model_forward.1} parent=1 // pred_region
      _
    $region73: #{language_model_forward.1} parent=1 // pred_fallthru
      _
    %644 = vsyncpa [#allocation3], 1
    %645 = vsyncpa [#allocation5], 1
    %646 = vsyncpa [#allocation8], 1

</llo_original>
